<compile_context>
chip_gen: v5e
topology: v5e:2x2
jax: 0.10.0
libtpu: 0.0.40
codegen_flags: <defaults>
</compile_context>

<pallas_src>
import functools
import numpy as np

import jax
import jax.numpy as jnp
from jax.experimental import pallas as pl
from jax.experimental.pallas import tpu as pltpu

NUM_CHANNELS = 16      # stand-in for argparse `num_channels`
IN_CH = 3
KERNEL_SIZE = 3
IMG = 32               # spatial size implied by the forward (5 pools -> 1x1)
NUM_CLASSES = 10
BT = 8                 # images per grid step (stacked along sublanes); M=256
IN_LANES = 128         # input slab lane width (96 real lanes + zero padding)
OUT_PAD = 128          # lane-dense padded output width (sliced to 10 outside)


# ------------------------------ setup-time probe ------------------------------

def _roll_matches_numpy():
    """One-time probe: does pltpu.roll(x, s, axis=0) follow jnp.roll semantics
    (out[i] = x[i - s])?  The conv kernel adapts its shift amounts either way."""
    def k(x_ref, o_ref):
        o_ref[...] = pltpu.roll(x_ref[...], shift=1, axis=0)

    x = jnp.arange(8 * 128, dtype=jnp.float32).reshape(8, 128)
    y = pl.pallas_call(k, out_shape=jax.ShapeDtypeStruct((8, 128), jnp.float32))(x)
    return bool(jnp.array_equal(y, jnp.roll(x, 1, axis=0)))


# ------------------------------ in-kernel helpers ------------------------------

def _conv3x3_relu(x, w_stacked, img_h, roll_like_numpy):
    """x: (M, W*Cin) f32 slab (BT images, img_h rows each, stacked along rows).
    w_stacked: (3*W*Cin, W*Cout) bf16 banded weights, ky-stacked along K.
    Row (ky) shift = XLU roll + per-image boundary mask; single MXU matmul."""
    m = x.shape[0]
    up_shift = 1 if roll_like_numpy else m - 1      # source row = row - 1
    dn_shift = m - 1 if roll_like_numpy else 1      # source row = row + 1
    rmod = jax.lax.broadcasted_iota(jnp.int32, x.shape, 0) % img_h
    x_up = jnp.where(rmod == 0, 0.0, pltpu.roll(x, shift=up_shift, axis=0))
    x_dn = jnp.where(rmod == img_h - 1, 0.0, pltpu.roll(x, shift=dn_shift, axis=0))
    xs = jnp.concatenate(
        [x_up.astype(jnp.bfloat16), x.astype(jnp.bfloat16), x_dn.astype(jnp.bfloat16)],
        axis=-1)                                     # (M, 3*W*Cin) bf16
    acc = jnp.dot(xs, w_stacked, preferred_element_type=jnp.float32)
    return jnp.maximum(acc, 0.0)                     # (M, W*Cout) f32


def _pool2x2(x, ph, pw):
    """2x2 avg pool = PH @ X @ PW with precomputed bf16 0/0.25 matrices."""
    y = jnp.dot(ph, x.astype(jnp.bfloat16), preferred_element_type=jnp.float32)
    return jnp.dot(y.astype(jnp.bfloat16), pw, preferred_element_type=jnp.float32)


# --------------------------------- fused kernel --------------------------------

def _myrtle5_kernel(x_ref, w1_ref, w2_ref, ph1_ref, pw1_ref, w3_ref,
                    ph2_ref, pw2_ref, w4_ref, rh_ref, wt_ref, o_ref,
                    *, roll_like_numpy=True):
    x = x_ref[...]                                                   # (BT*32, 128) f32
    x = _conv3x3_relu(x, w1_ref[...], IMG, roll_like_numpy)          # (256, 512)
    x = _conv3x3_relu(x, w2_ref[...], IMG, roll_like_numpy)          # (256, 512)
    x = _pool2x2(x, ph1_ref[...], pw1_ref[...])                      # (128, 256)
    x = _conv3x3_relu(x, w3_ref[...], IMG // 2, roll_like_numpy)     # (128, 256)
    x = _pool2x2(x, ph2_ref[...], pw2_ref[...])                      # ( 64, 128)
    x = _conv3x3_relu(x, w4_ref[...], IMG // 4, roll_like_numpy)     # ( 64, 128)
    # Fused tail: pool->pool->pool (== global 8x8 mean) + flatten + Linear,
    # all linear, folded into RH (row-sum per image) and WT ((PWg @ Wl.T)/64).
    y = jnp.dot(rh_ref[...], x.astype(jnp.bfloat16),
                preferred_element_type=jnp.float32)                  # (BT, 128)
    o_ref[...] = jnp.dot(y.astype(jnp.bfloat16), wt_ref[...],
                         preferred_element_type=jnp.float32)         # (BT, 128)


# ------------------------------ parameter repacking ----------------------------

def pack_params(params, bt=BT):
    """One-time (setup-time) repack of PyTorch-layout weights into bf16 banded /
    pooling matmul operands; done OUTSIDE the jitted forward."""
    c = NUM_CHANNELS

    def banded_stacked(w_oihw, w_spatial, k_pad=None):
        w = np.asarray(w_oihw, np.float32)            # (Cout, Cin, 3, 3)
        cout, cin = w.shape[0], w.shape[1]
        if k_pad is None:
            k_pad = w_spatial * cin
        m = np.zeros((3, k_pad, w_spatial * cout), np.float32)
        for ky in range(3):
            for kx in range(3):
                blk = w[:, :, ky, kx].T               # (Cin, Cout)
                for j in range(w_spatial):
                    jj = j + kx - 1                   # source column (padding=1)
                    if 0 <= jj < w_spatial:
                        m[ky, jj * cin:(jj + 1) * cin,
                          j * cout:(j + 1) * cout] = blk
        return jnp.asarray(m.reshape(3 * k_pad, w_spatial * cout), jnp.bfloat16)

    def pool_mats(rows, w_spatial):
        ph = np.zeros((rows // 2, rows), np.float32)
        r = np.arange(rows)
        ph[r // 2, r] = 1.0
        pw = np.zeros((w_spatial * c, (w_spatial // 2) * c), np.float32)
        k = np.arange(w_spatial * c)
        pw[k, (k // c // 2) * c + (k % c)] = 0.25     # 0.25 = the 2x2 avg scale
        return jnp.asarray(ph, jnp.bfloat16), jnp.asarray(pw, jnp.bfloat16)

    ph1, pw1 = pool_mats(bt * IMG, IMG)               # 32x32 -> 16x16 (stacked)
    ph2, pw2 = pool_mats(bt * (IMG // 2), IMG // 2)   # 16x16 ->  8x8

    # Per-image row-sum over the final 8 rows.
    rows8 = IMG // 4
    rh = np.zeros((bt, bt * rows8), np.float32)
    r = np.arange(bt * rows8)
    rh[r // rows8, r] = 1.0                           # (BT, BT*8)

    # Channel-sum over the final 8 W positions, * 1/64, fused with the Linear.
    pwg = np.zeros((rows8 * c, c), np.float32)        # (128, 16)
    k = np.arange(rows8 * c)
    pwg[k, k % c] = 1.0
    wl = np.asarray(params["linear"], np.float32)     # (10, 16)
    wt = np.zeros((rows8 * c, OUT_PAD), np.float32)   # (128, 128) lane-dense
    wt[:, :NUM_CLASSES] = (pwg @ wl.T) / float(rows8 * rows8)   # /64

    return {
        "w1": banded_stacked(params["conv1"], IMG, k_pad=IN_LANES),  # (384, 512)
        "w2": banded_stacked(params["conv2"], IMG),                  # (1536, 512)
        "w3": banded_stacked(params["conv3"], IMG // 2),             # (768, 256)
        "w4": banded_stacked(params["conv4"], IMG // 4),             # (384, 128)
        "ph1": ph1, "pw1": pw1, "ph2": ph2, "pw2": pw2,
        "rh": jnp.asarray(rh, jnp.bfloat16),
        "wt": jnp.asarray(wt, jnp.bfloat16),
    }


# ------------------------------------ forward ----------------------------------

def myrtle5_forward(x_nchw, packed, *, bt=BT, roll_like_numpy=True):
    n = x_nchw.shape[0]
    n_pad = ((n + bt - 1) // bt) * bt
    if n_pad != n:
        x_nchw = jnp.pad(x_nchw, ((0, n_pad - n), (0, 0), (0, 0), (0, 0)))

    # NCHW -> sublane-stacked, lane-dense slab: (n_pad*H, W*Cin), padded to 128 lanes.
    x = jnp.transpose(x_nchw, (0, 2, 3, 1)).reshape(n_pad * IMG, IMG * IN_CH)
    x = jnp.pad(x.astype(jnp.float32), ((0, 0), (0, IN_LANES - IMG * IN_CH)))

    w_args = (packed["w1"], packed["w2"], packed["ph1"], packed["pw1"],
              packed["w3"], packed["ph2"], packed["pw2"], packed["w4"],
              packed["rh"], packed["wt"])

    def const_spec(a):   # full array, same block every grid step
        return pl.BlockSpec(a.shape, lambda i: (0, 0))

    kernel = functools.partial(_myrtle5_kernel, roll_like_numpy=roll_like_numpy)

    out = pl.pallas_call(
        kernel,
        out_shape=jax.ShapeDtypeStruct((n_pad, OUT_PAD), jnp.float32),
        grid=(n_pad // bt,),
        in_specs=[pl.BlockSpec((bt * IMG, IN_LANES), lambda i: (i, 0))]
                 + [const_spec(a) for a in w_args],
        out_specs=pl.BlockSpec((bt, OUT_PAD), lambda i: (i, 0)),
        compiler_params=pltpu.CompilerParams(
            dimension_semantics=("parallel",),
            vmem_limit_bytes=32 * 1024 * 1024),
    )(x, *w_args)
    return out[:n, :NUM_CLASSES]


# ---------------------------- pure-JAX reference (f32) --------------------------

def reference_forward(x_nchw, params):
    def conv(v, w):
        return jax.lax.conv_general_dilated(
            v, w, (1, 1), ((1, 1), (1, 1)),
            dimension_numbers=("NCHW", "OIHW", "NCHW"))

    def pool(v):
        return jax.lax.reduce_window(
            v, 0.0, jax.lax.add, (1, 1, 2, 2), (1, 1, 2, 2), "VALID") / 4.0

    act = lambda v: jnp.maximum(v, 0.0)
    x = act(conv(x_nchw, params["conv1"]))
    x = pool(act(conv(x, params["conv2"])))
    x = pool(act(conv(x, params["conv3"])))
    x = pool(act(conv(x, params["conv4"])))
    x = pool(x)
    x = pool(x)
    x = x.reshape(x.shape[0], -1)
    return x @ params["linear"].T


# -------------------------------------- main ------------------------------------

if __name__ == "__main__":
    key = jax.random.PRNGKey(0)
    k_x, k1, k2, k3, k4, k5 = jax.random.split(key, 6)
    C = NUM_CHANNELS

    def uinit(k, shape, fan_in):
        bound = 1.0 / float(fan_in) ** 0.5
        return jax.random.uniform(k, shape, jnp.float32, -bound, bound)

    params = {
        "conv1": uinit(k1, (C, IN_CH, KERNEL_SIZE, KERNEL_SIZE), IN_CH * 9),
        "conv2": uinit(k2, (C, C, KERNEL_SIZE, KERNEL_SIZE), C * 9),
        "conv3": uinit(k3, (C, C, KERNEL_SIZE, KERNEL_SIZE), C * 9),
        "conv4": uinit(k4, (C, C, KERNEL_SIZE, KERNEL_SIZE), C * 9),
        "linear": uinit(k5, (NUM_CLASSES, C), C),
    }
    packed = pack_params(params)            # one-time bf16 weight repacking
    roll_np = _roll_matches_numpy()         # one-time roll-direction probe

    # batch=16 (= 2 grid steps of 8 stacked images), 3x32x32 so 5 pools -> 1x1.
    x = jax.random.normal(k_x, (16, IN_CH, IMG, IMG), jnp.float32)

    fwd = jax.jit(functools.partial(myrtle5_forward, roll_like_numpy=roll_np))
    out = jax.block_until_ready(fwd(x, packed))

    ref = reference_forward(x, params)
    assert out.shape == (16, NUM_CLASSES)
    # bf16 matmul operands with f32 accumulation -> slightly looser tolerance.
    assert jnp.allclose(out, ref, rtol=3e-2, atol=3e-2), \
        float(jnp.max(jnp.abs(out - ref)))
    print("KERNEL_OK")
</pallas_src>

<mosaic_0001>
module attributes {stable_mosaic.version = 11 : i64} {
  func.func @k(%arg0: memref<8x128xf32, #tpu.memory_space<vmem>>, %arg1: memref<8x128xf32, #tpu.memory_space<vmem>>) attributes {dimension_semantics = [], scalar_prefetch = 0 : i64, scratch_operands = 0 : i64, tpu.core_type = #tpu.core_type<tc>} {
    %c0 = arith.constant 0 : index
    %c0_0 = arith.constant 0 : index
    %0 = vector.load %arg0[%c0, %c0_0] : memref<8x128xf32, #tpu.memory_space<vmem>>, vector<8x128xf32>
    %c1_i32 = arith.constant 1 : i32
    %1 = tpu.dynamic_rotate %0 by %c1_i32 dim 0 : vector<8x128xf32>, i32 -> vector<8x128xf32>
    %c0_1 = arith.constant 0 : index
    %c0_2 = arith.constant 0 : index
    %2 = vector.load %arg1[%c0_1, %c0_2] : memref<8x128xf32, #tpu.memory_space<vmem>>, vector<8x128xf32>
    tpu.vector_store %arg1[%c0_1, %c0_2], %1 {strides = array<i32>} : memref<8x128xf32, #tpu.memory_space<vmem>>, vector<8x128xf32>,
    return
  }
}

</mosaic_0001>

<llo_original>
// kernel: tpu_custom_call.1
$region0: #{tpu_custom_call.1}
  #allocation0 [shape = 'u32[]', space=smem, size = 0x4, offset = 0x4, fixed_abs, tag = 'smem constant byte address 0x4 - core index']
  #allocation1 [shape = 'u32[72,128]{1,0:T(1,128)}', space=vmem, size = 0x9000, scoped, tag = 'internal scratch']
  %s0 = inlined_call_operand.hbm [shape: f32[8,128], index: 0, kind: input, shape index: {}]
  %s1 = inlined_call_operand.hbm [shape: f32[8,128], index: 1, kind: output, shape index: {}]
  %s2 = sld [smem:[#allocation0]]
  $region18: #{tpu_custom_call.1} parent=0
    _
  %s4 = ssub.s32 1, %s2
  %s5 = scalar_select 0, %s4, %s2
  $region1: #{tpu_custom_call.1} parent=0
    #allocation2 [shape = 'u8[4096]{0}', space=vmem, size = 0x1000, scoped, tag = 'input window, operand 0, single buffered']
    #allocation3 [shape = 's32[1]{0}', space=sflag, size = 0x4, scoped, tag = 'scoped memory for tpu_custom_call.1']
    #allocation4 [shape = 's32[1]{0}', space=sflag, size = 0x4, scoped, tag = 'scoped memory for tpu_custom_call.1']
    #allocation5 [shape = 'u8[4096]{0}', space=vmem, size = 0x1000, scoped, tag = 'output window, operand 0, single buffered']
    %6 = vsyncpa [#allocation3], 0
    %7 = vsyncpa [#allocation4], 0
    // Predicated region
    $region2: #{tpu_custom_call.1} parent=1 // pred_check
      _
    $region3: #{tpu_custom_call.1} parent=1 // pred_check_branch
      %9 = sbr.rel (0) target = $region5
    $region4: #{tpu_custom_call.1} parent=1 // pred_region
      %11 = vsyncadd [#allocation3], 0
      %s13 = sshll.u32 %s0, 4
      %s14 = int_to_ptr.hbm [resolvable:$true] %s13
      %s15 = sshll.u32 [#allocation2], 4
      %s16 = int_to_ptr.vmem [resolvable:$true] %s15
      %18 = dma.hbm_to_vmem [thread:$0]  %s14, 128, %s16, [#allocation3]
    $region5: #{tpu_custom_call.1} parent=1 // pred_fallthru
      _
    // Predicated region
    $region6: #{tpu_custom_call.1} parent=1 // pred_check
      _
    $region7: #{tpu_custom_call.1} parent=1 // pred_check_branch
      %20 = sbr.rel (0) target = $region9
    $region8: #{tpu_custom_call.1} parent=1 // pred_region
      %22 = dma.done [#allocation3], 128
    $region9: #{tpu_custom_call.1} parent=1 // pred_fallthru
      _
    %v23 = vld [vmem:[#allocation2] sm:$0xff]
    %v24 = vrot.slane %v23, 7
    %25 = vst [vmem:[#allocation5] sm:$0xff] %v24
    // Predicated region
    $region10: #{tpu_custom_call.1} parent=1 // pred_check
      _
    $region11: #{tpu_custom_call.1} parent=1 // pred_check_branch
      %27 = sbr.rel (0) target = $region13
    $region12: #{tpu_custom_call.1} parent=1 // pred_region
      %29 = vsyncadd [#allocation4], 0
      %s31 = sshll.u32 [#allocation5], 4
      %s32 = int_to_ptr.vmem [resolvable:$true] %s31
      %s33 = sshll.u32 %s1, 4
      %s34 = int_to_ptr.hbm [resolvable:$true] %s33
      %36 = dma.vmem_to_hbm [thread:$0]  %s32, 128, %s34, [#allocation4]
    $region13: #{tpu_custom_call.1} parent=1 // pred_fallthru
      _
    // Predicated region
    $region14: #{tpu_custom_call.1} parent=1 // pred_check
      _
    $region15: #{tpu_custom_call.1} parent=1 // pred_check_branch
      %38 = sbr.rel (0) target = $region17
    $region16: #{tpu_custom_call.1} parent=1 // pred_region
      %40 = dma.done [#allocation4], 128
    $region17: #{tpu_custom_call.1} parent=1 // pred_fallthru
      _
    %41 = vsyncpa [#allocation3], 1
    %42 = vsyncpa [#allocation4], 1

</llo_original>
